<compile_context>
chip_gen: v7x
topology: tpu7x:2x2x1
jax: 0.10.0
libtpu: 0.0.40
codegen_flags: <defaults>
</compile_context>

<pallas_src>
import jax
import jax.numpy as jnp
from jax.experimental import pallas as pl
from jax.experimental.pallas import tpu as pltpu


def _spectral_mul_kernel(x_ref, w_ref, o_ref):
    # Block shapes:
    #   x_ref : (2, Cin, B,     TM)   -- full batch, one 128-lane mode tile
    #   w_ref : (2, Cin, TCout, TM)
    #   o_ref : (2, B,   TCout, TM)
    cin = x_ref.shape[1]
    b = o_ref.shape[1]
    cout = o_ref.shape[2]
    tm = o_ref.shape[3]

    acc_r = jnp.zeros((b, cout, tm), jnp.float32)
    acc_i = jnp.zeros((b, cout, tm), jnp.float32)

    # Unrolled accumulation over Cin: only the two accumulators stay live.
    # TODO(synk): for Cin, Cout >= ~64 a complex-as-real 2x2-block matmul on
    # the MXU (per mode tile) would move these FLOPs off the VALU.
    for i in range(cin):
        xr = x_ref[0, i][:, None, :]      # (B, 1, TM)
        xi = x_ref[1, i][:, None, :]
        wr = w_ref[0, i][None, :, :]      # (1, TCout, TM)
        wi = w_ref[1, i][None, :, :]
        acc_r = acc_r + xr * wr - xi * wi
        acc_i = acc_i + xr * wi + xi * wr

    o_ref[0] = acc_r
    o_ref[1] = acc_i


def spectral_mul_pallas(x_packed, w_packed):
    """x_packed: (2, Cin, B, Mp) f32; w_packed: (2, Cin, Cout, Mp) f32.

    Returns (2, B, Cout, Mp) f32.  Mp must be a multiple of 128.
    """
    _, cin, b, mp = x_packed.shape
    _, _, cout, _ = w_packed.shape
    assert mp % 128 == 0, "mode dim must be padded to a multiple of 128"

    tm = 128                      # lane-dense mode tile
    n_mt = mp // tm
    # Split Cout across a second parallel grid axis when it tiles cleanly
    # (keeps both v7x TensorCores busy and halves resident weight blocks).
    n_ct = 2 if (cout % 16 == 0) else 1
    tcout = cout // n_ct

    out_shape = jax.ShapeDtypeStruct((2, b, cout, mp), jnp.float32)

    grid_spec = pltpu.PrefetchScalarGridSpec(
        num_scalar_prefetch=0,
        grid=(n_ct, n_mt),
        in_specs=[
            pl.BlockSpec((2, cin, b, tm), lambda c, m: (0, 0, 0, m)),
            pl.BlockSpec((2, cin, tcout, tm), lambda c, m: (0, 0, c, m)),
        ],
        out_specs=pl.BlockSpec((2, b, tcout, tm), lambda c, m: (0, 0, c, m)),
    )

    # Explicit VMEM budget: only raise the scoped limit when the
    # double-buffered block footprint actually needs it.
    x_block = 2 * cin * b * tm * 4
    w_block = 2 * cin * tcout * tm * 4
    o_block = 2 * b * tcout * tm * 4
    needed = 3 * (x_block + w_block + o_block)
    params = dict(dimension_semantics=("parallel", "parallel"))
    if needed > 32 * 2**20:
        params["vmem_limit_bytes"] = int(min(needed, 64 * 2**20))

    return pl.pallas_call(
        _spectral_mul_kernel,
        out_shape=out_shape,
        grid_spec=grid_spec,
        compiler_params=pltpu.CompilerParams(**params),
    )(x_packed, w_packed)


class SpectralConv2d:
    """JAX/Pallas port of the PyTorch SpectralConv2d module."""

    def __init__(self, in_channels, out_channels, modes1, modes2, key):
        self.in_channels = in_channels
        self.out_channels = out_channels
        self.modes1 = modes1
        self.modes2 = modes2
        scale = 1.0 / (in_channels * out_channels)
        k1, k2, k3, k4 = jax.random.split(key, 4)
        shape = (in_channels, out_channels, modes1, modes2)
        # torch.rand(..., dtype=cfloat): real and imag parts ~ U[0, 1)
        self.w1_re = scale * jax.random.uniform(k1, shape, dtype=jnp.float32)
        self.w1_im = scale * jax.random.uniform(k2, shape, dtype=jnp.float32)
        self.w2_re = scale * jax.random.uniform(k3, shape, dtype=jnp.float32)
        self.w2_im = scale * jax.random.uniform(k4, shape, dtype=jnp.float32)

        # Hoisted once (not per forward call): concat modes, flatten, pack
        # re/im, and zero-pad the mode dim to a multiple of 128 lanes.
        m = 2 * modes1 * modes2
        mp = ((m + 127) // 128) * 128
        wr = jnp.concatenate([self.w1_re, self.w2_re], axis=2).reshape(
            in_channels, out_channels, m)
        wi = jnp.concatenate([self.w1_im, self.w2_im], axis=2).reshape(
            in_channels, out_channels, m)
        w_packed = jnp.stack([wr, wi], axis=0)            # (2, Cin, Cout, M)
        w_packed = jnp.pad(w_packed, ((0, 0), (0, 0), (0, 0), (0, mp - m)))
        self.w_packed = w_packed                          # (2, Cin, Cout, Mp)
        self.M = m
        self.Mp = mp

    def __call__(self, x):
        # x: (B, Cin, H, W) float32   (NCHW, same as PyTorch)
        B, Cin, H, W = x.shape
        m1, m2 = self.modes1, self.modes2
        assert 2 * m1 <= H, "mode slices must not overlap"
        assert m2 <= W // 2 + 1, "modes2 exceeds rfft width"

        # --- glue: forward FFT ---------------------------------------------
        # TODO(synk): rfft2/irfft2 stay in XLA; no Pallas FFT primitive.
        x_ft = jnp.fft.rfft2(x)                     # (B, Cin, H, W//2+1) c64

        low = x_ft[:, :, :m1, :m2]                  # (B, Cin, m1, m2)
        high = x_ft[:, :, H - m1:, :m2]             # (B, Cin, m1, m2)
        xin = jnp.concatenate([low, high], axis=2)  # (B, Cin, 2*m1, m2)
        xin = xin.reshape(B, Cin, self.M)

        x_packed = jnp.stack(
            [jnp.real(xin), jnp.imag(xin)], axis=0).astype(jnp.float32)
        x_packed = jnp.transpose(x_packed, (0, 2, 1, 3))      # (2, Cin, B, M)
        x_packed = jnp.pad(
            x_packed, ((0, 0), (0, 0), (0, 0), (0, self.Mp - self.M)))

        # --- hot path: complex channel mixing in Pallas ---------------------
        out_packed = spectral_mul_pallas(x_packed, self.w_packed)
        out_re = out_packed[0, :, :, :self.M]
        out_im = out_packed[1, :, :, :self.M]
        out_c = (out_re + 1j * out_im).astype(jnp.complex64)
        out_c = out_c.reshape(B, self.out_channels, 2 * m1, m2)

        # --- glue: scatter into full spectrum + inverse FFT ------------------
        # TODO(synk): the band scatter + irfft2 stay in XLA; writing the two
        # mode bands directly from the kernel would avoid one full-spectrum
        # HBM round-trip but has no clean BlockSpec mapping with the
        # flattened-mode layout.
        out_ft = jnp.zeros((B, self.out_channels, H, W // 2 + 1),
                           dtype=jnp.complex64)
        out_ft = out_ft.at[:, :, :m1, :m2].set(out_c[:, :, :m1])
        out_ft = out_ft.at[:, :, H - m1:, :m2].set(out_c[:, :, m1:])

        return jnp.fft.irfft2(out_ft, s=(H, W))     # (B, Cout, H, W) f32


def _reference_forward(module, x):
    """Pure-JAX reference matching the PyTorch semantics."""
    B, Cin, H, W = x.shape
    m1, m2 = module.modes1, module.modes2
    x_ft = jnp.fft.rfft2(x)
    w1 = module.w1_re + 1j * module.w1_im
    w2 = module.w2_re + 1j * module.w2_im
    out_ft = jnp.zeros((B, module.out_channels, H, W // 2 + 1),
                       dtype=jnp.complex64)
    out_ft = out_ft.at[:, :, :m1, :m2].set(
        jnp.einsum('bixy,ioxy->boxy', x_ft[:, :, :m1, :m2], w1))
    out_ft = out_ft.at[:, :, H - m1:, :m2].set(
        jnp.einsum('bixy,ioxy->boxy', x_ft[:, :, H - m1:, :m2], w2))
    return jnp.fft.irfft2(out_ft, s=(H, W))


if __name__ == "__main__":
    key = jax.random.PRNGKey(0)
    k_param, k_x = jax.random.split(key)

    B, Cin, Cout, H, W = 2, 4, 4, 16, 16
    modes1, modes2 = 6, 6

    module = SpectralConv2d(Cin, Cout, modes1, modes2, k_param)
    x = jax.random.normal(k_x, (B, Cin, H, W), dtype=jnp.float32)

    out = module(x)
    out = jax.block_until_ready(out)

    ref = jax.block_until_ready(_reference_forward(module, x))
    assert out.shape == (B, Cout, H, W)
    assert out.dtype == jnp.float32
    assert jnp.allclose(out, ref, atol=1e-4, rtol=1e-4)

    print("KERNEL_OK")
</pallas_src>

<mosaic_0001>
module attributes {stable_mosaic.version = 11 : i64} {
  func.func @_spectral_mul_kernel(%arg0: i32, %arg1: i32, %arg2: memref<2x4x2x128xf32, #tpu.memory_space<vmem>>, %arg3: memref<2x4x4x128xf32, #tpu.memory_space<vmem>>, %arg4: memref<2x2x4x128xf32, #tpu.memory_space<vmem>>) attributes {dimension_semantics = [#tpu.dimension_semantics<parallel>, #tpu.dimension_semantics<parallel>], iteration_bounds = array<i64: 1, 1>, scalar_prefetch = 0 : i64, scratch_operands = 0 : i64, tpu.core_type = #tpu.core_type<tc>, window_params = [{transform_indices = @transform_0, window_bounds = array<i64: 2, 4, 2, 128>}, {transform_indices = @transform_1, window_bounds = array<i64: 2, 4, 4, 128>}, {transform_indices = @transform_2, window_bounds = array<i64: 2, 2, 4, 128>}]} {
    %cst = arith.constant 0.000000e+00 : f32
    %0 = vector.broadcast %cst : f32 to vector<2x4x128xf32>
    %cst_0 = arith.constant 0.000000e+00 : f32
    %1 = vector.broadcast %cst_0 : f32 to vector<2x4x128xf32>
    %c0 = arith.constant 0 : index
    %c0_1 = arith.constant 0 : index
    %c0_2 = arith.constant 0 : index
    %c0_3 = arith.constant 0 : index
    %2 = vector.load %arg2[%c0, %c0_1, %c0_2, %c0_3] : memref<2x4x2x128xf32, #tpu.memory_space<vmem>>, vector<1x1x2x128xf32>
    %3 = vector.shape_cast %2 : vector<1x1x2x128xf32> to vector<2x128xf32>
    %4 = vector.shape_cast %3 : vector<2x128xf32> to vector<2x1x128xf32>
    %c1 = arith.constant 1 : index
    %c0_4 = arith.constant 0 : index
    %c0_5 = arith.constant 0 : index
    %c0_6 = arith.constant 0 : index
    %5 = vector.load %arg2[%c1, %c0_4, %c0_5, %c0_6] : memref<2x4x2x128xf32, #tpu.memory_space<vmem>>, vector<1x1x2x128xf32>
    %6 = vector.shape_cast %5 : vector<1x1x2x128xf32> to vector<2x128xf32>
    %7 = vector.shape_cast %6 : vector<2x128xf32> to vector<2x1x128xf32>
    %c0_7 = arith.constant 0 : index
    %c0_8 = arith.constant 0 : index
    %c0_9 = arith.constant 0 : index
    %c0_10 = arith.constant 0 : index
    %8 = vector.load %arg3[%c0_7, %c0_8, %c0_9, %c0_10] : memref<2x4x4x128xf32, #tpu.memory_space<vmem>>, vector<1x1x4x128xf32>
    %9 = vector.shape_cast %8 : vector<1x1x4x128xf32> to vector<4x128xf32>
    %10 = vector.shape_cast %9 : vector<4x128xf32> to vector<1x4x128xf32>
    %c1_11 = arith.constant 1 : index
    %c0_12 = arith.constant 0 : index
    %c0_13 = arith.constant 0 : index
    %c0_14 = arith.constant 0 : index
    %11 = vector.load %arg3[%c1_11, %c0_12, %c0_13, %c0_14] : memref<2x4x4x128xf32, #tpu.memory_space<vmem>>, vector<1x1x4x128xf32>
    %12 = vector.shape_cast %11 : vector<1x1x4x128xf32> to vector<4x128xf32>
    %13 = vector.shape_cast %12 : vector<4x128xf32> to vector<1x4x128xf32>
    %14 = vector.broadcast %4 : vector<2x1x128xf32> to vector<2x4x128xf32>
    %15 = vector.broadcast %10 : vector<1x4x128xf32> to vector<2x4x128xf32>
    %16 = arith.mulf %14, %15 : vector<2x4x128xf32>
    %17 = arith.addf %0, %16 : vector<2x4x128xf32>
    %18 = vector.broadcast %7 : vector<2x1x128xf32> to vector<2x4x128xf32>
    %19 = vector.broadcast %13 : vector<1x4x128xf32> to vector<2x4x128xf32>
    %20 = arith.mulf %18, %19 : vector<2x4x128xf32>
    %21 = arith.subf %17, %20 : vector<2x4x128xf32>
    %22 = vector.broadcast %4 : vector<2x1x128xf32> to vector<2x4x128xf32>
    %23 = vector.broadcast %13 : vector<1x4x128xf32> to vector<2x4x128xf32>
    %24 = arith.mulf %22, %23 : vector<2x4x128xf32>
    %25 = arith.addf %1, %24 : vector<2x4x128xf32>
    %26 = vector.broadcast %7 : vector<2x1x128xf32> to vector<2x4x128xf32>
    %27 = vector.broadcast %10 : vector<1x4x128xf32> to vector<2x4x128xf32>
    %28 = arith.mulf %26, %27 : vector<2x4x128xf32>
    %29 = arith.addf %25, %28 : vector<2x4x128xf32>
    %c0_15 = arith.constant 0 : index
    %c1_16 = arith.constant 1 : index
    %c0_17 = arith.constant 0 : index
    %c0_18 = arith.constant 0 : index
    %30 = vector.load %arg2[%c0_15, %c1_16, %c0_17, %c0_18] : memref<2x4x2x128xf32, #tpu.memory_space<vmem>>, vector<1x1x2x128xf32>
    %31 = vector.shape_cast %30 : vector<1x1x2x128xf32> to vector<2x128xf32>
    %32 = vector.shape_cast %31 : vector<2x128xf32> to vector<2x1x128xf32>
    %c1_19 = arith.constant 1 : index
    %c1_20 = arith.constant 1 : index
    %c0_21 = arith.constant 0 : index
    %c0_22 = arith.constant 0 : index
    %33 = vector.load %arg2[%c1_19, %c1_20, %c0_21, %c0_22] : memref<2x4x2x128xf32, #tpu.memory_space<vmem>>, vector<1x1x2x128xf32>
    %34 = vector.shape_cast %33 : vector<1x1x2x128xf32> to vector<2x128xf32>
    %35 = vector.shape_cast %34 : vector<2x128xf32> to vector<2x1x128xf32>
    %c0_23 = arith.constant 0 : index
    %c1_24 = arith.constant 1 : index
    %c0_25 = arith.constant 0 : index
    %c0_26 = arith.constant 0 : index
    %36 = vector.load %arg3[%c0_23, %c1_24, %c0_25, %c0_26] : memref<2x4x4x128xf32, #tpu.memory_space<vmem>>, vector<1x1x4x128xf32>
    %37 = vector.shape_cast %36 : vector<1x1x4x128xf32> to vector<4x128xf32>
    %38 = vector.shape_cast %37 : vector<4x128xf32> to vector<1x4x128xf32>
    %c1_27 = arith.constant 1 : index
    %c1_28 = arith.constant 1 : index
    %c0_29 = arith.constant 0 : index
    %c0_30 = arith.constant 0 : index
    %39 = vector.load %arg3[%c1_27, %c1_28, %c0_29, %c0_30] : memref<2x4x4x128xf32, #tpu.memory_space<vmem>>, vector<1x1x4x128xf32>
    %40 = vector.shape_cast %39 : vector<1x1x4x128xf32> to vector<4x128xf32>
    %41 = vector.shape_cast %40 : vector<4x128xf32> to vector<1x4x128xf32>
    %42 = vector.broadcast %32 : vector<2x1x128xf32> to vector<2x4x128xf32>
    %43 = vector.broadcast %38 : vector<1x4x128xf32> to vector<2x4x128xf32>
    %44 = arith.mulf %42, %43 : vector<2x4x128xf32>
    %45 = arith.addf %21, %44 : vector<2x4x128xf32>
    %46 = vector.broadcast %35 : vector<2x1x128xf32> to vector<2x4x128xf32>
    %47 = vector.broadcast %41 : vector<1x4x128xf32> to vector<2x4x128xf32>
    %48 = arith.mulf %46, %47 : vector<2x4x128xf32>
    %49 = arith.subf %45, %48 : vector<2x4x128xf32>
    %50 = vector.broadcast %32 : vector<2x1x128xf32> to vector<2x4x128xf32>
    %51 = vector.broadcast %41 : vector<1x4x128xf32> to vector<2x4x128xf32>
    %52 = arith.mulf %50, %51 : vector<2x4x128xf32>
    %53 = arith.addf %29, %52 : vector<2x4x128xf32>
    %54 = vector.broadcast %35 : vector<2x1x128xf32> to vector<2x4x128xf32>
    %55 = vector.broadcast %38 : vector<1x4x128xf32> to vector<2x4x128xf32>
    %56 = arith.mulf %54, %55 : vector<2x4x128xf32>
    %57 = arith.addf %53, %56 : vector<2x4x128xf32>
    %c0_31 = arith.constant 0 : index
    %c2 = arith.constant 2 : index
    %c0_32 = arith.constant 0 : index
    %c0_33 = arith.constant 0 : index
    %58 = vector.load %arg2[%c0_31, %c2, %c0_32, %c0_33] : memref<2x4x2x128xf32, #tpu.memory_space<vmem>>, vector<1x1x2x128xf32>
    %59 = vector.shape_cast %58 : vector<1x1x2x128xf32> to vector<2x128xf32>
    %60 = vector.shape_cast %59 : vector<2x128xf32> to vector<2x1x128xf32>
    %c1_34 = arith.constant 1 : index
    %c2_35 = arith.constant 2 : index
    %c0_36 = arith.constant 0 : index
    %c0_37 = arith.constant 0 : index
    %61 = vector.load %arg2[%c1_34, %c2_35, %c0_36, %c0_37] : memref<2x4x2x128xf32, #tpu.memory_space<vmem>>, vector<1x1x2x128xf32>
    %62 = vector.shape_cast %61 : vector<1x1x2x128xf32> to vector<2x128xf32>
    %63 = vector.shape_cast %62 : vector<2x128xf32> to vector<2x1x128xf32>
    %c0_38 = arith.constant 0 : index
    %c2_39 = arith.constant 2 : index
    %c0_40 = arith.constant 0 : index
    %c0_41 = arith.constant 0 : index
    %64 = vector.load %arg3[%c0_38, %c2_39, %c0_40, %c0_41] : memref<2x4x4x128xf32, #tpu.memory_space<vmem>>, vector<1x1x4x128xf32>
    %65 = vector.shape_cast %64 : vector<1x1x4x128xf32> to vector<4x128xf32>
    %66 = vector.shape_cast %65 : vector<4x128xf32> to vector<1x4x128xf32>
    %c1_42 = arith.constant 1 : index
    %c2_43 = arith.constant 2 : index
    %c0_44 = arith.constant 0 : index
    %c0_45 = arith.constant 0 : index
    %67 = vector.load %arg3[%c1_42, %c2_43, %c0_44, %c0_45] : memref<2x4x4x128xf32, #tpu.memory_space<vmem>>, vector<1x1x4x128xf32>
    %68 = vector.shape_cast %67 : vector<1x1x4x128xf32> to vector<4x128xf32>
    %69 = vector.shape_cast %68 : vector<4x128xf32> to vector<1x4x128xf32>
    %70 = vector.broadcast %60 : vector<2x1x128xf32> to vector<2x4x128xf32>
    %71 = vector.broadcast %66 : vector<1x4x128xf32> to vector<2x4x128xf32>
    %72 = arith.mulf %70, %71 : vector<2x4x128xf32>
    %73 = arith.addf %49, %72 : vector<2x4x128xf32>
    %74 = vector.broadcast %63 : vector<2x1x128xf32> to vector<2x4x128xf32>
    %75 = vector.broadcast %69 : vector<1x4x128xf32> to vector<2x4x128xf32>
    %76 = arith.mulf %74, %75 : vector<2x4x128xf32>
    %77 = arith.subf %73, %76 : vector<2x4x128xf32>
    %78 = vector.broadcast %60 : vector<2x1x128xf32> to vector<2x4x128xf32>
    %79 = vector.broadcast %69 : vector<1x4x128xf32> to vector<2x4x128xf32>
    %80 = arith.mulf %78, %79 : vector<2x4x128xf32>
    %81 = arith.addf %57, %80 : vector<2x4x128xf32>
    %82 = vector.broadcast %63 : vector<2x1x128xf32> to vector<2x4x128xf32>
    %83 = vector.broadcast %66 : vector<1x4x128xf32> to vector<2x4x128xf32>
    %84 = arith.mulf %82, %83 : vector<2x4x128xf32>
    %85 = arith.addf %81, %84 : vector<2x4x128xf32>
    %c0_46 = arith.constant 0 : index
    %c3 = arith.constant 3 : index
    %c0_47 = arith.constant 0 : index
    %c0_48 = arith.constant 0 : index
    %86 = vector.load %arg2[%c0_46, %c3, %c0_47, %c0_48] : memref<2x4x2x128xf32, #tpu.memory_space<vmem>>, vector<1x1x2x128xf32>
    %87 = vector.shape_cast %86 : vector<1x1x2x128xf32> to vector<2x128xf32>
    %88 = vector.shape_cast %87 : vector<2x128xf32> to vector<2x1x128xf32>
    %c1_49 = arith.constant 1 : index
    %c3_50 = arith.constant 3 : index
    %c0_51 = arith.constant 0 : index
    %c0_52 = arith.constant 0 : index
    %89 = vector.load %arg2[%c1_49, %c3_50, %c0_51, %c0_52] : memref<2x4x2x128xf32, #tpu.memory_space<vmem>>, vector<1x1x2x128xf32>
    %90 = vector.shape_cast %89 : vector<1x1x2x128xf32> to vector<2x128xf32>
    %91 = vector.shape_cast %90 : vector<2x128xf32> to vector<2x1x128xf32>
    %c0_53 = arith.constant 0 : index
    %c3_54 = arith.constant 3 : index
    %c0_55 = arith.constant 0 : index
    %c0_56 = arith.constant 0 : index
    %92 = vector.load %arg3[%c0_53, %c3_54, %c0_55, %c0_56] : memref<2x4x4x128xf32, #tpu.memory_space<vmem>>, vector<1x1x4x128xf32>
    %93 = vector.shape_cast %92 : vector<1x1x4x128xf32> to vector<4x128xf32>
    %94 = vector.shape_cast %93 : vector<4x128xf32> to vector<1x4x128xf32>
    %c1_57 = arith.constant 1 : index
    %c3_58 = arith.constant 3 : index
    %c0_59 = arith.constant 0 : index
    %c0_60 = arith.constant 0 : index
    %95 = vector.load %arg3[%c1_57, %c3_58, %c0_59, %c0_60] : memref<2x4x4x128xf32, #tpu.memory_space<vmem>>, vector<1x1x4x128xf32>
    %96 = vector.shape_cast %95 : vector<1x1x4x128xf32> to vector<4x128xf32>
    %97 = vector.shape_cast %96 : vector<4x128xf32> to vector<1x4x128xf32>
    %98 = vector.broadcast %88 : vector<2x1x128xf32> to vector<2x4x128xf32>
    %99 = vector.broadcast %94 : vector<1x4x128xf32> to vector<2x4x128xf32>
    %100 = arith.mulf %98, %99 : vector<2x4x128xf32>
    %101 = arith.addf %77, %100 : vector<2x4x128xf32>
    %102 = vector.broadcast %91 : vector<2x1x128xf32> to vector<2x4x128xf32>
    %103 = vector.broadcast %97 : vector<1x4x128xf32> to vector<2x4x128xf32>
    %104 = arith.mulf %102, %103 : vector<2x4x128xf32>
    %105 = arith.subf %101, %104 : vector<2x4x128xf32>
    %106 = vector.broadcast %88 : vector<2x1x128xf32> to vector<2x4x128xf32>
    %107 = vector.broadcast %97 : vector<1x4x128xf32> to vector<2x4x128xf32>
    %108 = arith.mulf %106, %107 : vector<2x4x128xf32>
    %109 = arith.addf %85, %108 : vector<2x4x128xf32>
    %110 = vector.broadcast %91 : vector<2x1x128xf32> to vector<2x4x128xf32>
    %111 = vector.broadcast %94 : vector<1x4x128xf32> to vector<2x4x128xf32>
    %112 = arith.mulf %110, %111 : vector<2x4x128xf32>
    %113 = arith.addf %109, %112 : vector<2x4x128xf32>
    %c0_61 = arith.constant 0 : index
    %c0_62 = arith.constant 0 : index
    %c0_63 = arith.constant 0 : index
    %c0_64 = arith.constant 0 : index
    %114 = vector.load %arg4[%c0_61, %c0_62, %c0_63, %c0_64] : memref<2x2x4x128xf32, #tpu.memory_space<vmem>>, vector<1x2x4x128xf32>
    %115 = vector.shape_cast %114 : vector<1x2x4x128xf32> to vector<2x4x128xf32>
    %116 = vector.shape_cast %105 : vector<2x4x128xf32> to vector<1x2x4x128xf32>
    tpu.vector_store %arg4[%c0_61, %c0_62, %c0_63, %c0_64], %116 {strides = array<i32>} : memref<2x2x4x128xf32, #tpu.memory_space<vmem>>, vector<1x2x4x128xf32>,
    %c1_65 = arith.constant 1 : index
    %c0_66 = arith.constant 0 : index
    %c0_67 = arith.constant 0 : index
    %c0_68 = arith.constant 0 : index
    %117 = vector.load %arg4[%c1_65, %c0_66, %c0_67, %c0_68] : memref<2x2x4x128xf32, #tpu.memory_space<vmem>>, vector<1x2x4x128xf32>
    %118 = vector.shape_cast %117 : vector<1x2x4x128xf32> to vector<2x4x128xf32>
    %119 = vector.shape_cast %113 : vector<2x4x128xf32> to vector<1x2x4x128xf32>
    tpu.vector_store %arg4[%c1_65, %c0_66, %c0_67, %c0_68], %119 {strides = array<i32>} : memref<2x2x4x128xf32, #tpu.memory_space<vmem>>, vector<1x2x4x128xf32>,
    return
  }
  func.func @transform_0(%arg0: i32, %arg1: i32) -> (i32, i32, i32, i32) {
    %c0_i32 = arith.constant 0 : i32
    %c0_i32_0 = arith.constant 0 : i32
    %c0_i32_1 = arith.constant 0 : i32
    %c0_i32_2 = arith.constant 0 : i32
    return %c0_i32, %c0_i32_0, %c0_i32_1, %arg1 : i32, i32, i32, i32
  }
  func.func @transform_1(%arg0: i32, %arg1: i32) -> (i32, i32, i32, i32) {
    %c0_i32 = arith.constant 0 : i32
    %c0_i32_0 = arith.constant 0 : i32
    %c0_i32_1 = arith.constant 0 : i32
    return %c0_i32, %c0_i32_0, %arg0, %arg1 : i32, i32, i32, i32
  }
  func.func @transform_2(%arg0: i32, %arg1: i32) -> (i32, i32, i32, i32) {
    %c0_i32 = arith.constant 0 : i32
    %c0_i32_0 = arith.constant 0 : i32
    %c0_i32_1 = arith.constant 0 : i32
    return %c0_i32, %c0_i32_0, %arg0, %arg1 : i32, i32, i32, i32
  }
}

</mosaic_0001>

<llo_original>
// kernel: tpu_custom_call.1
$region0: #{tpu_custom_call.1}
  #allocation0 [shape = 'u32[]', space=smem, size = 0x4, offset = 0x4, fixed_abs, tag = 'smem constant byte address 0x4 - core index']
  #allocation1 [shape = 'u32[144,128]{1,0:T(1,128)}', space=vmem, size = 0x12000, scoped, tag = 'internal scratch']
  %s0 = inlined_call_operand.hbm [shape: f32[2,4,2,128], index: 0, kind: input, shape index: {}]
  %s1 = inlined_call_operand.hbm [shape: f32[2,4,4,128], index: 1, kind: input, shape index: {}]
  %s2 = inlined_call_operand.hbm [shape: f32[2,2,4,128], index: 2, kind: output, shape index: {}]
  %s3 = sld [smem:[#allocation0]]
  $region26: #{tpu_custom_call.1} parent=0
    _
  %s5 = ssub.s32 1, %s3
  %s6 = scalar_select 0, %s5, %s3
  $region1: #{tpu_custom_call.1} parent=0
    #allocation2 [shape = 'u8[8192]{0}', space=vmem, size = 0x2000, scoped, tag = 'input window, operand 0, single buffered']
    #allocation3 [shape = 's32[1]{0}', space=sflag, size = 0x4, scoped, tag = 'scoped memory for tpu_custom_call.1']
    #allocation4 [shape = 's32[1]{0}', space=sflag, size = 0x4, scoped, tag = 'scoped memory for tpu_custom_call.1']
    #allocation5 [shape = 'u8[16384]{0}', space=vmem, size = 0x4000, scoped, tag = 'input window, operand 1, single buffered']
    #allocation6 [shape = 's32[1]{0}', space=sflag, size = 0x4, scoped, tag = 'scoped memory for tpu_custom_call.1']
    #allocation7 [shape = 'u8[8192]{0}', space=vmem, size = 0x2000, scoped, tag = 'output window, operand 0, single buffered']
    %7 = vsyncpa [#allocation3], 0
    %8 = vsyncpa [#allocation6], 0
    %9 = vsyncpa [#allocation4], 0
    // Predicated region
    $region2: #{tpu_custom_call.1} parent=1 // pred_check
      _
    $region3: #{tpu_custom_call.1} parent=1 // pred_check_branch
      %11 = sbr.rel (0) target = $region5
    $region4: #{tpu_custom_call.1} parent=1 // pred_region
      %s13 = ssub.s32 256, 256
      %14 = vsyncadd [#allocation3], %s13
      %s15 = sshll.u32 [#allocation2], 4
      %s16 = int_to_ptr.vmem [resolvable:$true] %s15
      %21 = dma.hbm_to_vmem [thread:$0]  %s0, 256, %s16, [#allocation3], 32, 32, 2
    $region5: #{tpu_custom_call.1} parent=1 // pred_fallthru
      _
    // Predicated region
    $region6: #{tpu_custom_call.1} parent=1 // pred_check
      _
    $region7: #{tpu_custom_call.1} parent=1 // pred_check_branch
      %23 = sbr.rel (0) target = $region9
    $region8: #{tpu_custom_call.1} parent=1 // pred_region
      %s25 = ssub.s32 512, 512
      %26 = vsyncadd [#allocation6], %s25
      %s27 = sshll.u32 [#allocation5], 4
      %s28 = int_to_ptr.vmem [resolvable:$true] %s27
      %33 = dma.hbm_to_vmem [thread:$0]  %s1, 512, %s28, [#allocation6], 64, 64, 4
    $region9: #{tpu_custom_call.1} parent=1 // pred_fallthru
      _
    // Predicated region
    $region10: #{tpu_custom_call.1} parent=1 // pred_check
      _
    $region11: #{tpu_custom_call.1} parent=1 // pred_check_branch
      %35 = sbr.rel (0) target = $region13
    $region12: #{tpu_custom_call.1} parent=1 // pred_region
      %36 = dma.done [#allocation3], 256
    $region13: #{tpu_custom_call.1} parent=1 // pred_fallthru
      _
    // Predicated region
    $region14: #{tpu_custom_call.1} parent=1 // pred_check
      _
    $region15: #{tpu_custom_call.1} parent=1 // pred_check_branch
      %38 = sbr.rel (0) target = $region17
    $region16: #{tpu_custom_call.1} parent=1 // pred_region
      %39 = dma.done [#allocation6], 512
    $region17: #{tpu_custom_call.1} parent=1 // pred_fallthru
      _
    %v40 = vld [vmem:[#allocation2] sm:$0x3]
    %v43 = vunpack.c.l.s4 1966171168
    %v44 = vunpack.c.0.s8 %v43
    %v45 = vlaneseq
    %v46 = vshrl.u32 %v45, 7
    %v47 = vsub.s32 %v44, %v46
    %v48 = vrot.slane %v40, %v47
    %v49 = vcombine.high %v48, %v48
    %v51 = vunpack.c.l.s4 1966171168
    %v52 = vunpack.c.0.s8 %v51
    %v53 = vlaneseq
    %v54 = vshrl.u32 %v53, 7
    %v55 = vsub.s32 %v52, %v54
    %v56 = vrot.slane %v48, %v55
    %v58 = vunpack.c.l.s4 1966171168
    %v59 = vunpack.c.0.s8 %v58
    %v60 = vlaneseq
    %v61 = vshrl.u32 %v60, 7
    %v62 = vsub.s32 %v59, %v61
    %v63 = vrot.slane %v49, %v62
    %s64 = scalar_lea.vmem [#allocation2], 8
    %v65 = vld [vmem:[%s64] sm:$0x3]
    %v68 = vunpack.c.l.s4 1966171168
    %v69 = vunpack.c.0.s8 %v68
    %v70 = vlaneseq
    %v71 = vshrl.u32 %v70, 7
    %v72 = vsub.s32 %v69, %v71
    %v73 = vrot.slane %v65, %v72
    %v74 = vcombine.high %v73, %v73
    %v76 = vunpack.c.l.s4 1966171168
    %v77 = vunpack.c.0.s8 %v76
    %v78 = vlaneseq
    %v79 = vshrl.u32 %v78, 7
    %v80 = vsub.s32 %v77, %v79
    %v81 = vrot.slane %v73, %v80
    %v83 = vunpack.c.l.s4 1966171168
    %v84 = vunpack.c.0.s8 %v83
    %v85 = vlaneseq
    %v86 = vshrl.u32 %v85, 7
    %v87 = vsub.s32 %v84, %v86
    %v88 = vrot.slane %v74, %v87
    %v89 = vld [vmem:[#allocation5] sm:$0xf]
    %s90 = scalar_lea.vmem [#allocation5], 16
    %v91 = vld [vmem:[%s90] sm:$0xf]
    %v92 = vlaneseq
    %v93 = vshrl.u32 %v92, 7
    %v94 = vsub.s32 0, %v93
    %v95 = vrot.slane %v56, %v94
    %v96 = vlaneseq
    %v97 = vshrl.u32 %v96, 7
    %v98 = vsub.s32 0, %v97
    %v99 = vrot.slane %v63, %v98
    %v102 = vmul.f32 %v95, %v89
    %v103 = vmul.f32 %v99, %v89
    %v104 = vadd.f32 %v102, 0.0
    %v105 = vadd.f32 %v103, 0.0
    %v106 = vlaneseq
    %v107 = vshrl.u32 %v106, 7
    %v108 = vsub.s32 0, %v107
    %v109 = vrot.slane %v81, %v108
    %v110 = vlaneseq
    %v111 = vshrl.u32 %v110, 7
    %v112 = vsub.s32 0, %v111
    %v113 = vrot.slane %v88, %v112
    %v116 = vmul.f32 %v109, %v91
    %v117 = vmul.f32 %v113, %v91
    %v118 = vsub.f32 %v104, %v116
    %v119 = vsub.f32 %v105, %v117
    %v120 = vmul.f32 %v95, %v91
    %v121 = vmul.f32 %v99, %v91
    %v122 = vadd.f32 %v120, 0.0
    %v123 = vadd.f32 %v121, 0.0
    %v124 = vmul.f32 %v109, %v89
    %v125 = vmul.f32 %v113, %v89
    %v126 = vadd.f32 %v122, %v124
    %v127 = vadd.f32 %v123, %v125
    %s128 = scalar_lea.vmem [#allocation2], 2
    %v129 = vld [vmem:[%s128] sm:$0x3]
    %v132 = vunpack.c.l.s4 1966171168
    %v133 = vunpack.c.0.s8 %v132
    %v134 = vlaneseq
    %v135 = vshrl.u32 %v134, 7
    %v136 = vsub.s32 %v133, %v135
    %v137 = vrot.slane %v129, %v136
    %v138 = vcombine.high %v137, %v137
    %v140 = vunpack.c.l.s4 1966171168
    %v141 = vunpack.c.0.s8 %v140
    %v142 = vlaneseq
    %v143 = vshrl.u32 %v142, 7
    %v144 = vsub.s32 %v141, %v143
    %v145 = vrot.slane %v137, %v144
    %v147 = vunpack.c.l.s4 1966171168
    %v148 = vunpack.c.0.s8 %v147
    %v149 = vlaneseq
    %v150 = vshrl.u32 %v149, 7
    %v151 = vsub.s32 %v148, %v150
    %v152 = vrot.slane %v138, %v151
    %s153 = scalar_lea.vmem [#allocation2], 10
    %v154 = vld [vmem:[%s153] sm:$0x3]
    %v157 = vunpack.c.l.s4 1966171168
    %v158 = vunpack.c.0.s8 %v157
    %v159 = vlaneseq
    %v160 = vshrl.u32 %v159, 7
    %v161 = vsub.s32 %v158, %v160
    %v162 = vrot.slane %v154, %v161
    %v163 = vcombine.high %v162, %v162
    %v165 = vunpack.c.l.s4 1966171168
    %v166 = vunpack.c.0.s8 %v165
    %v167 = vlaneseq
    %v168 = vshrl.u32 %v167, 7
    %v169 = vsub.s32 %v166, %v168
    %v170 = vrot.slane %v162, %v169
    %v172 = vunpack.c.l.s4 1966171168
    %v173 = vunpack.c.0.s8 %v172
    %v174 = vlaneseq
    %v175 = vshrl.u32 %v174, 7
    %v176 = vsub.s32 %v173, %v175
    %v177 = vrot.slane %v163, %v176
    %s178 = scalar_lea.vmem [#allocation5], 4
    %v179 = vld [vmem:[%s178] sm:$0xf]
    %s180 = scalar_lea.vmem [#allocation5], 20
    %v181 = vld [vmem:[%s180] sm:$0xf]
    %v182 = vlaneseq
    %v183 = vshrl.u32 %v182, 7
    %v184 = vsub.s32 0, %v183
    %v185 = vrot.slane %v145, %v184
    %v186 = vlaneseq
    %v187 = vshrl.u32 %v186, 7
    %v188 = vsub.s32 0, %v187
    %v189 = vrot.slane %v152, %v188
    %v192 = vmul.f32 %v185, %v179
    %v193 = vmul.f32 %v189, %v179
    %v194 = vadd.f32 %v118, %v192
    %v195 = vadd.f32 %v119, %v193
    %v196 = vlaneseq
    %v197 = vshrl.u32 %v196, 7
    %v198 = vsub.s32 0, %v197
    %v199 = vrot.slane %v170, %v198
    %v200 = vlaneseq
    %v201 = vshrl.u32 %v200, 7
    %v202 = vsub.s32 0, %v201
    %v203 = vrot.slane %v177, %v202
    %v206 = vmul.f32 %v199, %v181
    %v207 = vmul.f32 %v203, %v181
    %v208 = vsub.f32 %v194, %v206
    %v209 = vsub.f32 %v195, %v207
    %v210 = vmul.f32 %v185, %v181
    %v211 = vmul.f32 %v189, %v181
    %v212 = vadd.f32 %v126, %v210
    %v213 = vadd.f32 %v127, %v211
    %v214 = vmul.f32 %v199, %v179
    %v215 = vmul.f32 %v203, %v179
    %v216 = vadd.f32 %v212, %v214
    %v217 = vadd.f32 %v213, %v215
    %s218 = scalar_lea.vmem [#allocation2], 4
    %v219 = vld [vmem:[%s218] sm:$0x3]
    %v222 = vunpack.c.l.s4 1966171168
    %v223 = vunpack.c.0.s8 %v222
    %v224 = vlaneseq
    %v225 = vshrl.u32 %v224, 7
    %v226 = vsub.s32 %v223, %v225
    %v227 = vrot.slane %v219, %v226
    %v228 = vcombine.high %v227, %v227
    %v230 = vunpack.c.l.s4 1966171168
    %v231 = vunpack.c.0.s8 %v230
    %v232 = vlaneseq
    %v233 = vshrl.u32 %v232, 7
    %v234 = vsub.s32 %v231, %v233
    %v235 = vrot.slane %v227, %v234
    %v237 = vunpack.c.l.s4 1966171168
    %v238 = vunpack.c.0.s8 %v237
    %v239 = vlaneseq
    %v240 = vshrl.u32 %v239, 7
    %v241 = vsub.s32 %v238, %v240
    %v242 = vrot.slane %v228, %v241
    %s243 = scalar_lea.vmem [#allocation2], 12
    %v244 = vld [vmem:[%s243] sm:$0x3]
    %v247 = vunpack.c.l.s4 1966171168
    %v248 = vunpack.c.0.s8 %v247
    %v249 = vlaneseq
    %v250 = vshrl.u32 %v249, 7
    %v251 = vsub.s32 %v248, %v250
    %v252 = vrot.slane %v244, %v251
    %v253 = vcombine.high %v252, %v252
    %v255 = vunpack.c.l.s4 1966171168
    %v256 = vunpack.c.0.s8 %v255
    %v257 = vlaneseq
    %v258 = vshrl.u32 %v257, 7
    %v259 = vsub.s32 %v256, %v258
    %v260 = vrot.slane %v252, %v259
    %v262 = vunpack.c.l.s4 1966171168
    %v263 = vunpack.c.0.s8 %v262
    %v264 = vlaneseq
    %v265 = vshrl.u32 %v264, 7
    %v266 = vsub.s32 %v263, %v265
    %v267 = vrot.slane %v253, %v266
    %s268 = scalar_lea.vmem [#allocation5], 8
    %v269 = vld [vmem:[%s268] sm:$0xf]
    %s270 = scalar_lea.vmem [#allocation5], 24
    %v271 = vld [vmem:[%s270] sm:$0xf]
    %v272 = vlaneseq
    %v273 = vshrl.u32 %v272, 7
    %v274 = vsub.s32 0, %v273
    %v275 = vrot.slane %v235, %v274
    %v276 = vlaneseq
    %v277 = vshrl.u32 %v276, 7
    %v278 = vsub.s32 0, %v277
    %v279 = vrot.slane %v242, %v278
    %v282 = vmul.f32 %v275, %v269
    %v283 = vmul.f32 %v279, %v269
    %v284 = vadd.f32 %v208, %v282
    %v285 = vadd.f32 %v209, %v283
    %v286 = vlaneseq
    %v287 = vshrl.u32 %v286, 7
    %v288 = vsub.s32 0, %v287
    %v289 = vrot.slane %v260, %v288
    %v290 = vlaneseq
    %v291 = vshrl.u32 %v290, 7
    %v292 = vsub.s32 0, %v291
    %v293 = vrot.slane %v267, %v292
    %v296 = vmul.f32 %v289, %v271
    %v297 = vmul.f32 %v293, %v271
    %v298 = vsub.f32 %v284, %v296
    %v299 = vsub.f32 %v285, %v297
    %v300 = vmul.f32 %v275, %v271
    %v301 = vmul.f32 %v279, %v271
    %v302 = vadd.f32 %v216, %v300
    %v303 = vadd.f32 %v217, %v301
    %v304 = vmul.f32 %v289, %v269
    %v305 = vmul.f32 %v293, %v269
    %v306 = vadd.f32 %v302, %v304
    %v307 = vadd.f32 %v303, %v305
    %s308 = scalar_lea.vmem [#allocation2], 6
    %v309 = vld [vmem:[%s308] sm:$0x3]
    %v312 = vunpack.c.l.s4 1966171168
    %v313 = vunpack.c.0.s8 %v312
    %v314 = vlaneseq
    %v315 = vshrl.u32 %v314, 7
    %v316 = vsub.s32 %v313, %v315
    %v317 = vrot.slane %v309, %v316
    %v318 = vcombine.high %v317, %v317
    %v320 = vunpack.c.l.s4 1966171168
    %v321 = vunpack.c.0.s8 %v320
    %v322 = vlaneseq
    %v323 = vshrl.u32 %v322, 7
    %v324 = vsub.s32 %v321, %v323
    %v325 = vrot.slane %v317, %v324
    %v327 = vunpack.c.l.s4 1966171168
    %v328 = vunpack.c.0.s8 %v327
    %v329 = vlaneseq
    %v330 = vshrl.u32 %v329, 7
    %v331 = vsub.s32 %v328, %v330
    %v332 = vrot.slane %v318, %v331
    %s333 = scalar_lea.vmem [#allocation2], 14
    %v334 = vld [vmem:[%s333] sm:$0x3]
    %v337 = vunpack.c.l.s4 1966171168
    %v338 = vunpack.c.0.s8 %v337
    %v339 = vlaneseq
    %v340 = vshrl.u32 %v339, 7
    %v341 = vsub.s32 %v338, %v340
    %v342 = vrot.slane %v334, %v341
    %v343 = vcombine.high %v342, %v342
    %v345 = vunpack.c.l.s4 1966171168
    %v346 = vunpack.c.0.s8 %v345
    %v347 = vlaneseq
    %v348 = vshrl.u32 %v347, 7
    %v349 = vsub.s32 %v346, %v348
    %v350 = vrot.slane %v342, %v349
    %v352 = vunpack.c.l.s4 1966171168
    %v353 = vunpack.c.0.s8 %v352
    %v354 = vlaneseq
    %v355 = vshrl.u32 %v354, 7
    %v356 = vsub.s32 %v353, %v355
    %v357 = vrot.slane %v343, %v356
    %s358 = scalar_lea.vmem [#allocation5], 12
    %v359 = vld [vmem:[%s358] sm:$0xf]
    %s360 = scalar_lea.vmem [#allocation5], 28
    %v361 = vld [vmem:[%s360] sm:$0xf]
    %v362 = vlaneseq
    %v363 = vshrl.u32 %v362, 7
    %v364 = vsub.s32 0, %v363
    %v365 = vrot.slane %v325, %v364
    %v366 = vlaneseq
    %v367 = vshrl.u32 %v366, 7
    %v368 = vsub.s32 0, %v367
    %v369 = vrot.slane %v332, %v368
    %v372 = vmul.f32 %v365, %v359
    %v373 = vmul.f32 %v369, %v359
    %v374 = vadd.f32 %v298, %v372
    %v375 = vadd.f32 %v299, %v373
    %v376 = vlaneseq
    %v377 = vshrl.u32 %v376, 7
    %v378 = vsub.s32 0, %v377
    %v379 = vrot.slane %v350, %v378
    %v380 = vlaneseq
    %v381 = vshrl.u32 %v380, 7
    %v382 = vsub.s32 0, %v381
    %v383 = vrot.slane %v357, %v382
    %v386 = vmul.f32 %v379, %v361
    %v387 = vmul.f32 %v383, %v361
    %v388 = vsub.f32 %v374, %v386
    %v389 = vsub.f32 %v375, %v387
    %v390 = vmul.f32 %v365, %v361
    %v391 = vmul.f32 %v369, %v361
    %v392 = vadd.f32 %v306, %v390
    %v393 = vadd.f32 %v307, %v391
    %v394 = vmul.f32 %v379, %v359
    %v395 = vmul.f32 %v383, %v359
    %v396 = vadd.f32 %v392, %v394
    %v397 = vadd.f32 %v393, %v395
    %398 = vst [vmem:[#allocation7] sm:$0xf] %v388
    %399 = vst [vmem:[#allocation7 + $0x4] sm:$0xf] %v389
    %s400 = scalar_lea.vmem [#allocation7], 8
    %401 = vst [vmem:[%s400] sm:$0xf] %v396
    %402 = vst [vmem:[%s400 + $0x4] sm:$0xf] %v397
    // Predicated region
    $region18: #{tpu_custom_call.1} parent=1 // pred_check
      _
    $region19: #{tpu_custom_call.1} parent=1 // pred_check_branch
      %404 = sbr.rel (0) target = $region21
    $region20: #{tpu_custom_call.1} parent=1 // pred_region
      %s406 = ssub.s32 256, 256
      %407 = vsyncadd [#allocation4], %s406
      %s408 = sshll.u32 [#allocation7], 4
      %s409 = int_to_ptr.vmem [resolvable:$true] %s408
      %414 = dma.vmem_to_hbm [thread:$0]  %s409, 256, %s2, [#allocation4], 64, 64, 4
    $region21: #{tpu_custom_call.1} parent=1 // pred_fallthru
      _
    // Predicated region
    $region22: #{tpu_custom_call.1} parent=1 // pred_check
      _
    $region23: #{tpu_custom_call.1} parent=1 // pred_check_branch
      %416 = sbr.rel (0) target = $region25
    $region24: #{tpu_custom_call.1} parent=1 // pred_region
      %417 = dma.done [#allocation4], 256
    $region25: #{tpu_custom_call.1} parent=1 // pred_fallthru
      _
    %418 = vsyncpa [#allocation3], 1
    %419 = vsyncpa [#allocation6], 1
    %420 = vsyncpa [#allocation4], 1

</llo_original>
